<compile_context>
chip_gen: v7x
topology: tpu7x:2x2x1
jax: 0.10.0
libtpu: 0.0.40
codegen_flags: <defaults>
</compile_context>

<pallas_src>
import functools

import jax
import jax.numpy as jnp
import numpy as np
from jax import lax
from jax.experimental import pallas as pl
from jax.experimental.pallas import tpu as pltpu

IN_EPS = 1e-5    # nn.InstanceNorm3d default eps
L2_EPS = 1e-12   # torch.nn.functional.normalize default eps

_VMEM_LIMIT_BYTES = 32 * 1024 * 1024
_BLOCK_BYTES_TARGET = 2 << 20   # ~2 MiB per (C, TS) f32 block


def _round_up(x, m):
    return ((x + m - 1) // m) * m


def _choose_spatial_tile(S, C):
    """Lane tile: multiple of 128, 512-2048 lanes preferred, VMEM-capped."""
    cap = max(128, ((_BLOCK_BYTES_TARGET // (4 * C)) // 128) * 128)
    ts = min(2048, cap, _round_up(S, 128))
    return max(128, ts)


# ----------------------------------------------------------------------------
# Pass 1: per-(n, c) mean and inv-std, streamed over spatial tiles.
# ----------------------------------------------------------------------------
def _stats_kernel(x_ref, mean_ref, rstd_ref, sum_sc, sq_sc, *, inv_count):
    """x_ref: (1, C, TS); mean_ref/rstd_ref: (1, C, 1); scratch: (C, 1) f32."""
    s = pl.program_id(1)

    @pl.when(s == 0)
    def _():
        sum_sc[...] = jnp.zeros_like(sum_sc)
        sq_sc[...] = jnp.zeros_like(sq_sc)

    x = x_ref[0].astype(jnp.float32)                       # (C, TS)
    sum_sc[...] += jnp.sum(x, axis=-1, keepdims=True)      # lane (XLU) reduce
    sq_sc[...] += jnp.sum(x * x, axis=-1, keepdims=True)

    @pl.when(s == pl.num_programs(1) - 1)
    def _():
        # Single-pass variance E[x^2] - mean^2 (padded lanes are zero, the
        # true element count is folded into inv_count).
        # TODO(synk): switch to a two-pass / Welford combine if bit-level
        # parity with the reference two-pass variance is ever required.
        mean = sum_sc[...] * inv_count
        var = jnp.maximum(sq_sc[...] * inv_count - mean * mean, 0.0)
        mean_ref[0] = mean
        rstd_ref[0] = lax.rsqrt(var + IN_EPS)


# ----------------------------------------------------------------------------
# Pass 2: normalize + optional channel-wise L2 + per-channel affine.
# ----------------------------------------------------------------------------
def _norm_kernel(x_ref, mean_ref, rstd_ref, w_ref, b_ref, o_ref, *, l2):
    """x_ref/o_ref: (1, C, TS); mean/rstd: (1, C, 1); w/b: (C, 1)."""
    x = x_ref[0].astype(jnp.float32)                       # (C, TS)
    a = rstd_ref[0]                                        # (C, 1)
    mean = mean_ref[0]                                     # (C, 1)

    if l2:
        c = -mean * a                                      # fold: xn = x*a + c
        y = x * a + c
        sq = jnp.sum(y * y, axis=0, keepdims=True)         # (1, TS) sublane reduce
        # 1 / max(sqrt(sq), eps) == rsqrt(max(sq, eps^2)) -> single EUP op.
        inv = lax.rsqrt(jnp.maximum(sq, L2_EPS * L2_EPS))
        out = y * inv * w_ref[...] + b_ref[...]
    else:
        A = a * w_ref[...]                                 # (C, 1)
        B = b_ref[...] - mean * A                          # (C, 1)
        out = x * A + B                                    # one mul + one add

    o_ref[0] = out.astype(o_ref.dtype)


def domain_norm3d(x, weight, bias, *, l2=True, spatial_tile=None):
    """x: (N, C, D, H, W); weight/bias broadcastable to (1, C, 1, 1, 1)."""
    N, C, D, H, W = x.shape
    S = D * H * W
    in_dtype = x.dtype

    x2 = x.reshape(N, C, S)                                # no dtype upcast
    w = jnp.asarray(weight, jnp.float32).reshape(C, 1)
    b = jnp.asarray(bias, jnp.float32).reshape(C, 1)

    if spatial_tile is None:
        TS = _choose_spatial_tile(S, C)
    else:
        TS = max(128, _round_up(int(spatial_tile), 128))

    S_pad = _round_up(S, TS)
    if S_pad != S:
        # Zero-pad so every load/store is lane-dense and unmasked; zeros do
        # not perturb the sums (true count folded into inv_count below).
        x2 = jnp.pad(x2, ((0, 0), (0, 0), (0, S_pad - S)))
    num_tiles = S_pad // TS

    compiler_params_stats = pltpu.CompilerParams(
        dimension_semantics=("parallel", "arbitrary"),
        vmem_limit_bytes=_VMEM_LIMIT_BYTES)
    compiler_params_norm = pltpu.CompilerParams(
        dimension_semantics=("parallel", "parallel"),
        vmem_limit_bytes=_VMEM_LIMIT_BYTES)

    # ---- pass 1: per-(n, c) statistics -------------------------------------
    mean, rstd = pl.pallas_call(
        functools.partial(_stats_kernel, inv_count=1.0 / S),
        out_shape=(jax.ShapeDtypeStruct((N, C, 1), jnp.float32),
                   jax.ShapeDtypeStruct((N, C, 1), jnp.float32)),
        grid_spec=pltpu.PrefetchScalarGridSpec(
            num_scalar_prefetch=0,
            grid=(N, num_tiles),
            in_specs=[pl.BlockSpec((1, C, TS), lambda n, s: (n, 0, s))],
            out_specs=[pl.BlockSpec((1, C, 1), lambda n, s: (n, 0, 0)),
                       pl.BlockSpec((1, C, 1), lambda n, s: (n, 0, 0))],
            scratch_shapes=[pltpu.VMEM((C, 1), jnp.float32),
                            pltpu.VMEM((C, 1), jnp.float32)]),
        compiler_params=compiler_params_stats,
    )(x2)

    # ---- pass 2: normalize + L2 + affine, fully tile-parallel ---------------
    out = pl.pallas_call(
        functools.partial(_norm_kernel, l2=l2),
        out_shape=jax.ShapeDtypeStruct((N, C, S_pad), in_dtype),
        grid_spec=pltpu.PrefetchScalarGridSpec(
            num_scalar_prefetch=0,
            grid=(N, num_tiles),
            in_specs=[pl.BlockSpec((1, C, TS), lambda n, s: (n, 0, s)),
                      pl.BlockSpec((1, C, 1), lambda n, s: (n, 0, 0)),
                      pl.BlockSpec((1, C, 1), lambda n, s: (n, 0, 0)),
                      pl.BlockSpec((C, 1), lambda n, s: (0, 0)),
                      pl.BlockSpec((C, 1), lambda n, s: (0, 0))],
            out_specs=pl.BlockSpec((1, C, TS), lambda n, s: (n, 0, s))),
        compiler_params=compiler_params_norm,
    )(x2, mean, rstd, w, b)

    if S_pad != S:
        out = out[:, :, :S]
    return out.reshape(N, C, D, H, W)


def _reference(x, weight, bias, *, l2=True):
    """Pure-JAX reference with the exact PyTorch semantics."""
    xf = x.astype(jnp.float32)
    mean = jnp.mean(xf, axis=(2, 3, 4), keepdims=True)
    var = jnp.mean((xf - mean) ** 2, axis=(2, 3, 4), keepdims=True)
    xn = (xf - mean) / jnp.sqrt(var + IN_EPS)
    if l2:
        nrm = jnp.sqrt(jnp.sum(xn * xn, axis=1, keepdims=True))
        xn = xn / jnp.maximum(nrm, L2_EPS)
    return (xn * weight + bias).astype(x.dtype)


if __name__ == "__main__":
    key = jax.random.PRNGKey(0)
    kx, kw, kb, kx2 = jax.random.split(key, 4)

    # ---- case 1: l2=True, lane-aligned spatial volume, multi-tile grid -----
    N, C, D, H, W = 2, 16, 4, 16, 16        # S = 1024
    x = jax.random.normal(kx, (N, C, D, H, W), dtype=jnp.float32)
    weight = 1.0 + 0.1 * jax.random.normal(kw, (1, C, 1, 1, 1), jnp.float32)
    bias = 0.1 * jax.random.normal(kb, (1, C, 1, 1, 1), jnp.float32)

    out = jax.block_until_ready(
        domain_norm3d(x, weight, bias, l2=True, spatial_tile=256))
    ref = jax.block_until_ready(_reference(x, weight, bias, l2=True))
    np.testing.assert_allclose(np.asarray(out), np.asarray(ref),
                               rtol=2e-4, atol=2e-5)

    # ---- case 2: l2=False, non-128-multiple spatial volume (padding path) --
    N2, C2, D2, H2, W2 = 1, 8, 3, 5, 7      # S = 105 -> padded to 128
    x2 = jax.random.normal(kx2, (N2, C2, D2, H2, W2), dtype=jnp.float32)
    w2 = jnp.ones((1, C2, 1, 1, 1), jnp.float32) * 1.5
    b2 = jnp.full((1, C2, 1, 1, 1), -0.25, jnp.float32)

    out2 = jax.block_until_ready(domain_norm3d(x2, w2, b2, l2=False))
    ref2 = jax.block_until_ready(_reference(x2, w2, b2, l2=False))
    np.testing.assert_allclose(np.asarray(out2), np.asarray(ref2),
                               rtol=2e-4, atol=2e-5)

    print("KERNEL_OK")
</pallas_src>

<mosaic_0001>
module attributes {stable_mosaic.version = 11 : i64} {
  func.func @_stats_kernel(%arg0: i32, %arg1: i32, %arg2: memref<1x16x256xf32, #tpu.memory_space<vmem>>, %arg3: memref<1x16x1xf32, #tpu.memory_space<vmem>>, %arg4: memref<1x16x1xf32, #tpu.memory_space<vmem>>, %arg5: memref<16x1xf32, #tpu.memory_space<vmem>>, %arg6: memref<16x1xf32, #tpu.memory_space<vmem>>) attributes {dimension_semantics = [#tpu.dimension_semantics<parallel>, #tpu.dimension_semantics<arbitrary>], iteration_bounds = array<i64: 2, 4>, scalar_prefetch = 0 : i64, scratch_operands = 2 : i64, tpu.core_type = #tpu.core_type<tc>, window_params = [{transform_indices = @transform_0, window_bounds = array<i64: 1, 16, 256>}, {transform_indices = @transform_1, window_bounds = array<i64: 1, 16, 1>}, {transform_indices = @transform_2, window_bounds = array<i64: 1, 16, 1>}]} {
    %c0_i32 = arith.constant 0 : i32
    %0 = arith.cmpi eq, %arg1, %c0_i32 : i32
    %1 = arith.extui %0 : i1 to i32
    %c0_i32_0 = arith.constant 0 : i32
    %2 = arith.cmpi ne, %1, %c0_i32_0 : i32
    scf.if %2 {
      %cst_13 = arith.constant 0.000000e+00 : f32
      %19 = vector.broadcast %cst_13 : f32 to vector<16x1xf32>
      %c0_14 = arith.constant 0 : index
      %c0_15 = arith.constant 0 : index
      %20 = vector.load %arg5[%c0_14, %c0_15] : memref<16x1xf32, #tpu.memory_space<vmem>>, vector<16x1xf32>
      tpu.vector_store %arg5[%c0_14, %c0_15], %19 {strides = array<i32>} : memref<16x1xf32, #tpu.memory_space<vmem>>, vector<16x1xf32>,
      %cst_16 = arith.constant 0.000000e+00 : f32
      %21 = vector.broadcast %cst_16 : f32 to vector<16x1xf32>
      %c0_17 = arith.constant 0 : index
      %c0_18 = arith.constant 0 : index
      %22 = vector.load %arg6[%c0_17, %c0_18] : memref<16x1xf32, #tpu.memory_space<vmem>>, vector<16x1xf32>
      tpu.vector_store %arg6[%c0_17, %c0_18], %21 {strides = array<i32>} : memref<16x1xf32, #tpu.memory_space<vmem>>, vector<16x1xf32>,
    } else {
    }
    %c0 = arith.constant 0 : index
    %c0_1 = arith.constant 0 : index
    %c0_2 = arith.constant 0 : index
    %3 = vector.load %arg2[%c0, %c0_1, %c0_2] : memref<1x16x256xf32, #tpu.memory_space<vmem>>, vector<1x16x256xf32>
    %4 = vector.shape_cast %3 : vector<1x16x256xf32> to vector<16x256xf32>
    %c0_3 = arith.constant 0 : index
    %c0_4 = arith.constant 0 : index
    %5 = vector.load %arg5[%c0_3, %c0_4] : memref<16x1xf32, #tpu.memory_space<vmem>>, vector<16x1xf32>
    %cst = arith.constant dense<0.000000e+00> : vector<16xf32>
    %6 = vector.multi_reduction <add>, %4, %cst [1] : vector<16x256xf32> to vector<16xf32>
    %7 = vector.shape_cast %6 : vector<16xf32> to vector<16x1xf32>
    %8 = arith.addf %5, %7 : vector<16x1xf32>
    %c0_5 = arith.constant 0 : index
    %c0_6 = arith.constant 0 : index
    %9 = vector.load %arg5[%c0_5, %c0_6] : memref<16x1xf32, #tpu.memory_space<vmem>>, vector<16x1xf32>
    tpu.vector_store %arg5[%c0_5, %c0_6], %8 {strides = array<i32>} : memref<16x1xf32, #tpu.memory_space<vmem>>, vector<16x1xf32>,
    %c0_7 = arith.constant 0 : index
    %c0_8 = arith.constant 0 : index
    %10 = vector.load %arg6[%c0_7, %c0_8] : memref<16x1xf32, #tpu.memory_space<vmem>>, vector<16x1xf32>
    %11 = arith.mulf %4, %4 : vector<16x256xf32>
    %cst_9 = arith.constant dense<0.000000e+00> : vector<16xf32>
    %12 = vector.multi_reduction <add>, %11, %cst_9 [1] : vector<16x256xf32> to vector<16xf32>
    %13 = vector.shape_cast %12 : vector<16xf32> to vector<16x1xf32>
    %14 = arith.addf %10, %13 : vector<16x1xf32>
    %c0_10 = arith.constant 0 : index
    %c0_11 = arith.constant 0 : index
    %15 = vector.load %arg6[%c0_10, %c0_11] : memref<16x1xf32, #tpu.memory_space<vmem>>, vector<16x1xf32>
    tpu.vector_store %arg6[%c0_10, %c0_11], %14 {strides = array<i32>} : memref<16x1xf32, #tpu.memory_space<vmem>>, vector<16x1xf32>,
    %c3_i32 = arith.constant 3 : i32
    %16 = arith.cmpi eq, %arg1, %c3_i32 : i32
    %17 = arith.extui %16 : i1 to i32
    %c0_i32_12 = arith.constant 0 : i32
    %18 = arith.cmpi ne, %17, %c0_i32_12 : i32
    scf.if %18 {
      %c0_13 = arith.constant 0 : index
      %c0_14 = arith.constant 0 : index
      %19 = vector.load %arg5[%c0_13, %c0_14] : memref<16x1xf32, #tpu.memory_space<vmem>>, vector<16x1xf32>
      %cst_15 = arith.constant 9.765625E-4 : f32
      %20 = vector.broadcast %cst_15 : f32 to vector<16x1xf32>
      %21 = arith.mulf %19, %20 : vector<16x1xf32>
      %c0_16 = arith.constant 0 : index
      %c0_17 = arith.constant 0 : index
      %22 = vector.load %arg6[%c0_16, %c0_17] : memref<16x1xf32, #tpu.memory_space<vmem>>, vector<16x1xf32>
      %cst_18 = arith.constant 9.765625E-4 : f32
      %23 = vector.broadcast %cst_18 : f32 to vector<16x1xf32>
      %24 = arith.mulf %22, %23 : vector<16x1xf32>
      %25 = arith.mulf %21, %21 : vector<16x1xf32>
      %26 = arith.subf %24, %25 : vector<16x1xf32>
      %cst_19 = arith.constant 0.000000e+00 : f32
      %27 = vector.broadcast %cst_19 : f32 to vector<16x1xf32>
      %28 = arith.maximumf %26, %27 : vector<16x1xf32>
      %c0_20 = arith.constant 0 : index
      %c0_21 = arith.constant 0 : index
      %c0_22 = arith.constant 0 : index
      %29 = vector.load %arg3[%c0_20, %c0_21, %c0_22] : memref<1x16x1xf32, #tpu.memory_space<vmem>>, vector<1x16x1xf32>
      %30 = vector.shape_cast %29 : vector<1x16x1xf32> to vector<16x1xf32>
      %31 = vector.shape_cast %21 : vector<16x1xf32> to vector<1x16x1xf32>
      tpu.vector_store %arg3[%c0_20, %c0_21, %c0_22], %31 {strides = array<i32>} : memref<1x16x1xf32, #tpu.memory_space<vmem>>, vector<1x16x1xf32>,
      %cst_23 = arith.constant 9.99999974E-6 : f32
      %32 = vector.broadcast %cst_23 : f32 to vector<16x1xf32>
      %33 = arith.addf %28, %32 : vector<16x1xf32>
      %34 = math.rsqrt %33 : vector<16x1xf32>
      %c0_24 = arith.constant 0 : index
      %c0_25 = arith.constant 0 : index
      %c0_26 = arith.constant 0 : index
      %35 = vector.load %arg4[%c0_24, %c0_25, %c0_26] : memref<1x16x1xf32, #tpu.memory_space<vmem>>, vector<1x16x1xf32>
      %36 = vector.shape_cast %35 : vector<1x16x1xf32> to vector<16x1xf32>
      %37 = vector.shape_cast %34 : vector<16x1xf32> to vector<1x16x1xf32>
      tpu.vector_store %arg4[%c0_24, %c0_25, %c0_26], %37 {strides = array<i32>} : memref<1x16x1xf32, #tpu.memory_space<vmem>>, vector<1x16x1xf32>,
    } else {
    }
    return
  }
  func.func @transform_0(%arg0: i32, %arg1: i32) -> (i32, i32, i32) {
    %c0_i32 = arith.constant 0 : i32
    %c0_i32_0 = arith.constant 0 : i32
    return %arg0, %c0_i32, %arg1 : i32, i32, i32
  }
  func.func @transform_1(%arg0: i32, %arg1: i32) -> (i32, i32, i32) {
    %c0_i32 = arith.constant 0 : i32
    %c0_i32_0 = arith.constant 0 : i32
    %c0_i32_1 = arith.constant 0 : i32
    return %arg0, %c0_i32, %c0_i32_0 : i32, i32, i32
  }
  func.func @transform_2(%arg0: i32, %arg1: i32) -> (i32, i32, i32) {
    %c0_i32 = arith.constant 0 : i32
    %c0_i32_0 = arith.constant 0 : i32
    %c0_i32_1 = arith.constant 0 : i32
    return %arg0, %c0_i32, %c0_i32_0 : i32, i32, i32
  }
}

</mosaic_0001>

<llo_original>
// kernel: tpu_custom_call.1
$region0: #{tpu_custom_call.1}
  #allocation0 [shape = 'u32[]', space=smem, size = 0x4, offset = 0x4, fixed_abs, tag = 'smem constant byte address 0x4 - core index']
  #allocation1 [shape = 'u32[144,128]{1,0:T(1,128)}', space=vmem, size = 0x12000, scoped, tag = 'internal scratch']
  #allocation2 [shape = 'f32[16,1]{1,0:T(8,128)}', space=vmem, size = 0x2000, scoped, tag = 'scratch operand']
  #allocation3 [shape = 'f32[16,1]{1,0:T(8,128)}', space=vmem, size = 0x2000, scoped, tag = 'scratch operand']
  %s0 = inlined_call_operand.hbm [shape: f32[2,16,1024], index: 0, kind: input, shape index: {}]
  %s1 = inlined_call_operand.vmem [shape: f32[2,16,1], index: 1, kind: output, shape index: {0}]
  %s2 = inlined_call_operand.vmem [shape: f32[2,16,1], index: 2, kind: output, shape index: {1}]
  %3 = xla_tuple %s1, %s2
  %s4 = sld [smem:[#allocation0]]
  $region57: #{tpu_custom_call.1} parent=0
    _
  %s6 = ssub.s32 1, %s4
  %s7 = scalar_select 0, %s6, %s4
  $region1: #{tpu_custom_call.1} parent=0
    #allocation4 [shape = 'u8[32768]{0}', space=vmem, size = 0x8000, scoped, tag = 'input window, operand 0']
    #allocation5 [shape = 's32[2]{0}', space=sflag, size = 0x8, scoped, tag = 'scoped memory for tpu_custom_call.1']
    %8 = vsyncpa [#allocation5], 0
    %s9 = scalar_lea.sflag [#allocation5], 1
    %10 = vsyncpa %s9, 0
    loop: start=0, step=1, limit=10
    $region2: #{tpu_custom_call.1} parent=1 // loop_pre_header
      _
    $region3: #{tpu_custom_call.1} parent=1 // loop_header
      %s12 = sphi 0, %s16
      %p13 = scmp.ge.s32.totalorder %s12, 10
      %s19 = sphi 0, %s31
      %s20 = sphi 0, %s27
      %s21 = sphi 0, %s19
      %s22 = sphi 0, %s20
      %s23 = sphi 0, %s21
      %s24 = sphi 0, %s22
      %s36 = sphi 0, %s38
      %s39 = sphi 0, %s36
      %s40 = sphi 0, %s39
      %s56 = sphi 0, %s40
      %s62 = sphi 0, %s64
      %s65 = sphi 0, %s62
      %s66 = sphi 0, %s65
      %s82 = sphi 0, %s66
      %s88 = sphi 0, %s90
      %s91 = sphi 0, %s88
      %s92 = sphi 0, %s91
      %s108 = sphi 0, %s92
    $region4: #{tpu_custom_call.1} parent=1 // loop_header_branch
      %15 = sbr.rel (%p13) target = $region8
    $region5: #{tpu_custom_call.1} parent=1 // loop_body
      %s17 = ssub.s32 %s12, 1
      %s18 = ssub.s32 %s12, 2
      %s25 = sadd.s32 1, %s20
      %p26 = scmp.ge.s32.totalorder %s25, 4
      %s27 = scalar_select %p26, 0, %s25
      %s28 = sadd.s32 1, %s19
      %s29 = scalar_select %p26, %s28, %s19
      %p30 = scmp.ge.s32.totalorder %s29, 2
      %s31 = scalar_select %p30, 0, %s29
      %s32 = ssub.s32 %s19, %s31
      %s33 = ssub.s32 %s20, %s27
      %s34 = sor.u32 %s32, %s33
      %p35 = scmp.eq.s32.totalorder %s34, 0
      %s37 = sadd.s32 %s36, 1
      %s38 = scalar_select %p35, %s36, %s37
      %p41 = pneg %p35
      %p42 = scmp.eq.s32.totalorder %s12, 7
      %p43 = por %p41, %p42
      %p44 = scmp.ne.s32.totalorder %s36, %s39
      %p45 = scmp.eq.s32.totalorder %s12, 0
      %p46 = por %p44, %p45
      %p47 = scmp.ne.s32.totalorder %s36, %s39
      %p48 = scmp.eq.s32.totalorder %s17, 7
      %p49 = por %p47, %p48
      %p50 = scmp.ne.s32.totalorder %s39, %s40
      %p51 = scmp.eq.s32.totalorder %s17, 0
      %p52 = por %p50, %p51
      %p53 = scmp.ne.s32.totalorder %s39, %s40
      %p54 = scmp.eq.s32.totalorder %s18, 7
      %p55 = por %p53, %p54
      %p57 = scmp.ne.s32.totalorder %s40, %s56
      %p58 = scmp.eq.s32.totalorder %s18, 0
      %p59 = por %p57, %p58
      %s60 = ssub.s32 %s19, %s31
      %p61 = scmp.eq.s32.totalorder %s60, 0
      %s63 = sadd.s32 %s62, 1
      %s64 = scalar_select %p61, %s62, %s63
      %p67 = pneg %p61
      %p68 = scmp.eq.s32.totalorder %s12, 7
      %p69 = por %p67, %p68
      %p70 = scmp.ne.s32.totalorder %s62, %s65
      %p71 = scmp.eq.s32.totalorder %s12, 0
      %p72 = por %p70, %p71
      %p73 = scmp.ne.s32.totalorder %s62, %s65
      %p74 = scmp.eq.s32.totalorder %s17, 7
      %p75 = por %p73, %p74
      %p76 = scmp.ne.s32.totalorder %s65, %s66
      %p77 = scmp.eq.s32.totalorder %s17, 0
      %p78 = por %p76, %p77
      %p79 = scmp.ne.s32.totalorder %s65, %s66
      %p80 = scmp.eq.s32.totalorder %s18, 7
      %p81 = por %p79, %p80
      %p83 = scmp.ne.s32.totalorder %s66, %s82
      %p84 = scmp.eq.s32.totalorder %s18, 0
      %p85 = por %p83, %p84
      %s86 = ssub.s32 %s19, %s31
      %p87 = scmp.eq.s32.totalorder %s86, 0
      %s89 = sadd.s32 %s88, 1
      %s90 = scalar_select %p87, %s88, %s89
      %p93 = pneg %p87
      %p94 = scmp.eq.s32.totalorder %s12, 7
      %p95 = por %p93, %p94
      %p96 = scmp.ne.s32.totalorder %s88, %s91
      %p97 = scmp.eq.s32.totalorder %s12, 0
      %p98 = por %p96, %p97
      %p99 = scmp.ne.s32.totalorder %s88, %s91
      %p100 = scmp.eq.s32.totalorder %s17, 7
      %p101 = por %p99, %p100
      %p102 = scmp.ne.s32.totalorder %s91, %s92
      %p103 = scmp.eq.s32.totalorder %s17, 0
      %p104 = por %p102, %p103
      %p105 = scmp.ne.s32.totalorder %s91, %s92
      %p106 = scmp.eq.s32.totalorder %s18, 7
      %p107 = por %p105, %p106
      %p109 = scmp.ne.s32.totalorder %s92, %s108
      %p110 = scmp.eq.s32.totalorder %s18, 0
      %p111 = por %p109, %p110
      %p112 = scmp.le.s32.totalorder 1, %s12
      %p113 = scmp.lt.s32.totalorder %s12, 9
      %p114 = pnand %p112, %p113
      %p115 = pneg %p114
      // Predicated region
      $region9: #{tpu_custom_call.1} parent=5 // pred_check
        _
      $region10: #{tpu_custom_call.1} parent=5 // pred_check_branch
        %117 = sbr.rel (%p114) target = $region12
      $region11: #{tpu_custom_call.1} parent=5 // pred_region
        %s118 = ssub.s32 %s12, 1
      $region12: #{tpu_custom_call.1} parent=5 // pred_fallthru
        _
      %p119 = scmp.lt.s32.totalorder %s12, 8
      // Predicated region
      $region13: #{tpu_custom_call.1} parent=5 // pred_check
        %p120 = pneg %p119
      $region14: #{tpu_custom_call.1} parent=5 // pred_check_branch
        %122 = sbr.rel (%p120) target = $region16
      $region15: #{tpu_custom_call.1} parent=5 // pred_region
        // Predicated region
        $region17: #{tpu_custom_call.1} parent=15 // pred_check
          %p123 = pneg %p46
        $region18: #{tpu_custom_call.1} parent=15 // pred_check_branch
          %125 = sbr.rel (%p123) target = $region20
        $region19: #{tpu_custom_call.1} parent=15 // pred_region
          %s126 = sand.u32 %s36, 1
          %s127 = scalar_lea.sflag [#allocation5], %s126
          %s128 = sand.u32 %s36, 1
          %s129 = smul.addr %s128, 32
          %s130 = scalar_lea.vmem [#allocation4], %s129
          %s131 = smul.u32 2, %s20
          %s133 = ssub.s32 512, 512
          %134 = vsyncadd %s127, %s133
          %s135 = smul.addr %s19, 16
          %s136 = sadd.s32 %s131, %s135
          %s137 = smul.addr %s136, 128
          %s138 = scalar_lea.hbm %s0, %s137
          %s139 = sshll.u32 %s130, 4
          %s140 = int_to_ptr.vmem [resolvable:$true] %s139
          %145 = dma.hbm_to_vmem [thread:$0]  %s138, 512, %s140, %s127, 1024, 256, 16
        $region20: #{tpu_custom_call.1} parent=15 // pred_fallthru
          _
      $region16: #{tpu_custom_call.1} parent=5 // pred_fallthru
        _
      %p146 = scmp.le.s32.totalorder 1, %s12
      %p147 = scmp.lt.s32.totalorder %s12, 9
      %p148 = pnand %p146, %p147
      %p149 = pneg %p148
      // Predicated region
      $region21: #{tpu_custom_call.1} parent=5 // pred_check
        _
      $region22: #{tpu_custom_call.1} parent=5 // pred_check_branch
        %151 = sbr.rel (%p148) target = $region24
      $region23: #{tpu_custom_call.1} parent=5 // pred_region
        %s152 = ssub.s32 %s12, 1
        %s153 = sand.u32 %s39, 1
        %s154 = scalar_lea.sflag [#allocation5], %s153
        %s155 = sand.u32 %s39, 1
        %s156 = smul.addr %s155, 32
        %s157 = scalar_lea.vmem [#allocation4], %s156
        // Predicated region
        $region25: #{tpu_custom_call.1} parent=23 // pred_check
          %p158 = pneg %p52
        $region26: #{tpu_custom_call.1} parent=23 // pred_check_branch
          %160 = sbr.rel (%p158) target = $region28
        $region27: #{tpu_custom_call.1} parent=23 // pred_region
          %161 = dma.done %s154, 512
        $region28: #{tpu_custom_call.1} parent=23 // pred_fallthru
          _
        %s162 = sand.u32 %s39, 1
        %s163 = scalar_lea.sflag [#allocation5], %s162
        %s164 = sand.u32 %s39, 1
        %s165 = smul.addr %s164, 32
        %s166 = scalar_lea.vmem [#allocation4], %s165
        %p167 = pneg %p52
        %p168 = pneg %p49
        %p169 = pneg %p78
        %p170 = pneg %p75
        %p171 = scmp.lt.s32.totalorder %s21, 1
        %s172 = scalar_select %p171, %s21, 1
        %s173 = smul.addr %s172, 2
        %s174 = smul.addr %s173, 8
        %s175 = scalar_lea.vmem %s1, %s174
        %p176 = pneg %p104
        %p177 = pneg %p101
        %p178 = scmp.lt.s32.totalorder %s21, 1
        %s179 = scalar_select %p178, %s21, 1
        %s180 = smul.addr %s179, 2
        %s181 = smul.addr %s180, 8
        %s182 = scalar_lea.vmem %s2, %s181
        %s183 = smul.u32 2, %s22
        %p184 = scmp.lt.s32.totalorder %s21, 1
        %s185 = scalar_select %p184, %s21, 1
        %s186 = smul.addr %s185, 2
        %s187 = smul.addr %s186, 8
        %s188 = scalar_lea.vmem %s1, %s187
        %p189 = scmp.lt.s32.totalorder %s21, 1
        %s190 = scalar_select %p189, %s21, 1
        %s191 = smul.addr %s190, 2
        %s192 = smul.addr %s191, 8
        %s193 = scalar_lea.vmem %s2, %s192
        %p194 = scmp.eq.s32.totalorder %s22, 0
        // Predicated region
        $region29: #{tpu_custom_call.1} parent=23 // pred_check
          %p195 = pneg %p194
        $region30: #{tpu_custom_call.1} parent=23 // pred_check_branch
          %197 = sbr.rel (%p195) target = $region32
        $region31: #{tpu_custom_call.1} parent=23 // pred_region
          %vm198 = vcmask 7168
          %199 = vst.msk [vmem:[#allocation2] sm:$0xff] %vm198, 0.0
          %200 = vst.msk [vmem:[#allocation2 + $0x8] sm:$0xff] %vm198, 0.0
          %201 = vst.msk [vmem:[#allocation3] sm:$0xff] %vm198, 0.0
          %202 = vst.msk [vmem:[#allocation3 + $0x8] sm:$0xff] %vm198, 0.0
        $region32: #{tpu_custom_call.1} parent=23 // pred_fallthru
          _
        %v203 = vld [vmem:[%s157] sm:$0xff]
        %v204 = vld [vmem:[%s157 + $0x8] sm:$0xff]
        %v205 = vld [vmem:[%s157 + $0x10] sm:$0xff]
        %v206 = vld [vmem:[%s157 + $0x18] sm:$0xff]
        %v207 = vld [vmem:[#allocation2] sm:$0xff]
        %v208 = vld [vmem:[#allocation2 + $0x8] sm:$0xff]
        %v209 = vadd.f32 %v203, %v204
        %210 = vadd.xlane.f32.xlu0 %v209
        %v211 = vpop.xlane.xlu0 %210
        %v212 = vadd.f32 %v205, %v206
        %213 = vadd.xlane.f32.xlu0 %v212
        %v214 = vpop.xlane.xlu0 %213
        %v215 = vadd.f32 %v207, %v211
        %v216 = vadd.f32 %v208, %v214
        %vm217 = vcmask 7168
        %218 = vst.msk [vmem:[#allocation2] sm:$0xff] %vm217, %v215
        %219 = vst.msk [vmem:[#allocation2 + $0x8] sm:$0xff] %vm217, %v216
        %v220 = vld [vmem:[#allocation3] sm:$0xff]
        %v221 = vld [vmem:[#allocation3 + $0x8] sm:$0xff]
        %v222 = vmul.f32 %v203, %v203
        %v223 = vmul.f32 %v204, %v204
        %v224 = vmul.f32 %v205, %v205
        %v225 = vmul.f32 %v206, %v206
        %v226 = vadd.f32 %v222, %v223
        %227 = vadd.xlane.f32.xlu0 %v226
        %v228 = vpop.xlane.xlu0 %227
        %v229 = vadd.f32 %v224, %v225
        %230 = vadd.xlane.f32.xlu0 %v229
        %v231 = vpop.xlane.xlu0 %230
        %v232 = vadd.f32 %v220, %v228
        %v233 = vadd.f32 %v221, %v231
        %234 = vst.msk [vmem:[#allocation3] sm:$0xff] %vm217, %v232
        %235 = vst.msk [vmem:[#allocation3 + $0x8] sm:$0xff] %vm217, %v233
        %p236 = scmp.eq.s32.totalorder %s22, 3
        // Predicated region
        $region33: #{tpu_custom_call.1} parent=23 // pred_check
          %p237 = pneg %p236
        $region34: #{tpu_custom_call.1} parent=23 // pred_check_branch
          %239 = sbr.rel (%p237) target = $region36
        $region35: #{tpu_custom_call.1} parent=23 // pred_region
          %v240 = vld [vmem:[#allocation2] sm:$0xff]
          %v241 = vld [vmem:[#allocation2 + $0x8] sm:$0xff]
          %v242 = vmul.f32 %v240, 0.0009765625
          %v243 = vmul.f32 %v241, 0.0009765625
          %v244 = vld [vmem:[#allocation3] sm:$0xff]
          %v245 = vld [vmem:[#allocation3 + $0x8] sm:$0xff]
          %v246 = vmul.f32 %v244, 0.0009765625
          %v247 = vmul.f32 %v245, 0.0009765625
          %v248 = vmul.f32 %v242, %v242
          %v249 = vmul.f32 %v243, %v243
          %v250 = vsub.f32 %v246, %v248
          %v251 = vsub.f32 %v247, %v249
          %v252 = vmax.f32 %v250, 0.0
          %v253 = vmax.f32 %v251, 0.0
          %254 = vst.msk [vmem:[%s188] sm:$0xff] %vm217, %v242
          %255 = vst.msk [vmem:[%s188 + $0x8] sm:$0xff] %vm217, %v243
          %v256 = vadd.f32 %v252, 1e-05
          %v257 = vadd.f32 %v253, 1e-05
          %v258 = vrsqrt.pop %v256
          %v259 = vrsqrt.pop %v257
          %260 = vst.msk [vmem:[%s193] sm:$0xff] %vm217, %v258
          %261 = vst.msk [vmem:[%s193 + $0x8] sm:$0xff] %vm217, %v259
        $region36: #{tpu_custom_call.1} parent=23 // pred_fallthru
          _
        %p262 = scmp.lt.s32.totalorder %s21, 1
        %s263 = scalar_select %p262, %s21, 1
        %s264 = smul.addr %s263, 2
        %s265 = smul.addr %s264, 8
        %s266 = scalar_lea.vmem %s1, %s265
        %p267 = scmp.lt.s32.totalorder %s21, 1
        %s268 = scalar_select %p267, %s21, 1
        %s269 = smul.addr %s268, 2
        %s270 = smul.addr %s269, 8
        %s271 = scalar_lea.vmem %s2, %s270
        // Predicated region
        $region37: #{tpu_custom_call.1} parent=23 // pred_check
          %p272 = pneg %p75
        $region38: #{tpu_custom_call.1} parent=23 // pred_check_branch
          %274 = sbr.rel (%p272) target = $region40
        $region39: #{tpu_custom_call.1} parent=23 // pred_region
          _
        $region40: #{tpu_custom_call.1} parent=23 // pred_fallthru
          _
        // Predicated region
        $region41: #{tpu_custom_call.1} parent=23 // pred_check
          %p275 = pneg %p101
        $region42: #{tpu_custom_call.1} parent=23 // pred_check_branch
          %277 = sbr.rel (%p275) target = $region44
        $region43: #{tpu_custom_call.1} parent=23 // pred_region
          _
        $region44: #{tpu_custom_call.1} parent=23 // pred_fallthru
          _
      $region24: #{tpu_custom_call.1} parent=5 // pred_fallthru
        _
      %p278 = scmp.le.s32.totalorder 2, %s12
      // Predicated region
      $region45: #{tpu_custom_call.1} parent=5 // pred_check
        %p279 = pneg %p278
      $region46: #{tpu_custom_call.1} parent=5 // pred_check_branch
        %281 = sbr.rel (%p279) target = $region48
      $region47: #{tpu_custom_call.1} parent=5 // pred_region
        %s282 = ssub.s32 %s12, 2
        // Predicated region
        $region49: #{tpu_custom_call.1} parent=47 // pred_check
          %p283 = pneg %p81
        $region50: #{tpu_custom_call.1} parent=47 // pred_check_branch
          %285 = sbr.rel (%p283) target = $region52
        $region51: #{tpu_custom_call.1} parent=47 // pred_region
          %p286 = scmp.lt.s32.totalorder %s23, 1
          %s287 = scalar_select %p286, %s23, 1
          %s288 = smul.addr %s287, 2
          %s289 = smul.addr %s288, 8
          %s290 = scalar_lea.vmem %s1, %s289
        $region52: #{tpu_custom_call.1} parent=47 // pred_fallthru
          _
        // Predicated region
        $region53: #{tpu_custom_call.1} parent=47 // pred_check
          %p291 = pneg %p107
        $region54: #{tpu_custom_call.1} parent=47 // pred_check_branch
          %293 = sbr.rel (%p291) target = $region56
        $region55: #{tpu_custom_call.1} parent=47 // pred_region
          %p294 = scmp.lt.s32.totalorder %s23, 1
          %s295 = scalar_select %p294, %s23, 1
          %s296 = smul.addr %s295, 2
          %s297 = smul.addr %s296, 8
          %s298 = scalar_lea.vmem %s2, %s297
        $region56: #{tpu_custom_call.1} parent=47 // pred_fallthru
          _
      $region48: #{tpu_custom_call.1} parent=5 // pred_fallthru
        _
    $region6: #{tpu_custom_call.1} parent=1 // loop_footer
      %s16 = sadd.s32 1, %s12
    $region7: #{tpu_custom_call.1} parent=1 // loop_footer_branch
      %11 = sbr.rel target = $region3
    $region8: #{tpu_custom_call.1} parent=1 // loop_exit
      _
    %299 = vsyncpa [#allocation5], 1
    %s300 = scalar_lea.sflag [#allocation5], 1
    %301 = vsyncpa %s300, 1

</llo_original>
